<compile_context>
chip_gen: v6e
topology: v6e:2x2x1
jax: 0.10.0
libtpu: 0.0.40
codegen_flags: <defaults>
</compile_context>

<pallas_src>
import functools

import jax
import jax.numpy as jnp
from jax.experimental import pallas as pl
from jax.experimental.pallas import tpu as pltpu


# ----------------------------------------------------------------------------
# Pallas kernel: elementwise  y = s * clip(trunc(x / s), min_q, max_q)
# ----------------------------------------------------------------------------
def _scale_quant_kernel(scale_ref, x_ref, o_ref, *, min_q, max_q):
    # scale_ref: (1, 1) f32 in SMEM  (the learnable quantization step)
    # x_ref    : (TM, C) tile in VMEM, native input dtype
    # o_ref    : (TM, C) tile in VMEM, same dtype as the input
    s = scale_ref[0, 0]
    x = x_ref[...].astype(jnp.float32)          # upcast on the vreg only
    # torch: q = clip((x/scale).to(int), min_q, max_q) -> trunc toward zero.
    # Exact divide kept (not x * (1/s)) for bit parity with the torch module.
    q = jnp.clip(jnp.trunc(x / s), min_q, max_q)
    o_ref[...] = (s * q).astype(o_ref.dtype)


# ----------------------------------------------------------------------------
# Wrapper: layout plumbing (flatten -> lane-dense 2D slab -> tiled grid)
# ----------------------------------------------------------------------------
def scale_quant_forward(x, scale_param, bit=8, half=True,
                        *, target_block_bytes=4 * 1024 * 1024):
    qbit = bit + 1 if half else bit
    max_q = float(2.0 ** qbit - 1.0)
    min_q = float(-(2.0 ** qbit))

    orig_shape = x.shape
    dtype = x.dtype
    itemsize = jnp.dtype(dtype).itemsize
    # Sublane multiple of the native tile: f32 -> 8, bf16/f16 -> 16, int8 -> 32.
    sub_mult = max(8, 32 // itemsize)

    xf = x.reshape(-1)                 # free bitcast for contiguous layouts
    T = xf.shape[0]

    # Lane-dense layout: last dim a multiple of 128 (unmasked full-lane stores).
    pad = (-T) % 128
    if pad:
        # NOTE: jnp.pad and the final out[:T] each cost a full HBM copy in XLA;
        # this path is only taken when the element count is not a multiple of
        # 128.  TODO(synk): handle the ragged tail in-kernel (scalar-prefetch T
        # + masked pltpu.store on the last block) to keep odd sizes at 2 passes.
        xf = jnp.pad(xf, (0, pad))
    Tp = T + pad
    C = 128
    for cand in (1024, 512, 256):
        if Tp % cand == 0:
            C = cand
            break
    R = Tp // C
    x2d = xf.reshape(R, C)

    # Row tile: ~target_block_bytes per block, sublane-aligned for the dtype,
    # and split into >= 2 (even) grid steps when possible so both v7x
    # TensorCores stream in parallel (harmless on single-TC v5e/v6e).
    tm_target = max(sub_mult,
                    (target_block_bytes // (itemsize * C)) // sub_mult * sub_mult)
    if R <= sub_mult:
        TM = R                                    # full-dim block (layout-legal)
    else:
        nsteps = max(2, pl.cdiv(R, tm_target))
        if nsteps % 2:
            nsteps += 1                           # even step count for megacore
        TM = max(sub_mult, pl.cdiv(pl.cdiv(R, nsteps), sub_mult) * sub_mult)
    grid = pl.cdiv(R, TM)                         # ragged last tile handled by Pallas

    scale2d = jnp.asarray(scale_param, jnp.float32).reshape(1, 1)
    kernel = functools.partial(_scale_quant_kernel, min_q=min_q, max_q=max_q)

    out = pl.pallas_call(
        kernel,
        out_shape=jax.ShapeDtypeStruct((R, C), dtype),   # native dtype out
        grid_spec=pltpu.PrefetchScalarGridSpec(
            num_scalar_prefetch=0,
            grid=(grid,),
            in_specs=[
                pl.BlockSpec(memory_space=pltpu.MemorySpace.SMEM),   # scale
                pl.BlockSpec((TM, C), lambda i: (i, 0)),             # x tile
            ],
            out_specs=pl.BlockSpec((TM, C), lambda i: (i, 0)),
        ),
        compiler_params=pltpu.CompilerParams(
            dimension_semantics=("parallel",),        # megacore-shardable axis
            # Explicit limit: keeps v5e (16 MiB scoped default) fully
            # double-buffered; 2x-buffered in+out at 4 MiB blocks ~= 16 MiB.
            vmem_limit_bytes=32 * 1024 * 1024,
        ),
    )(scale2d, x2d)

    out = out.reshape(-1)
    if pad:
        out = out[:T]
    return out.reshape(orig_shape)


# ----------------------------------------------------------------------------
# Module wrapper (inference forward of ScaleLayer)
# ----------------------------------------------------------------------------
class ScaleLayerPallas:
    """JAX/Pallas port of ScaleLayer.forward (fixed learnable-scale fake quant)."""

    def __init__(self, scale=2.0 ** (-5), bit=8, half=True):
        self.scale = jnp.asarray([scale], jnp.float32)   # nn.Parameter([scale])
        self.bit = bit
        self.half = half

    def __call__(self, x):
        # TODO(synk): the custom autograd backward (STE-style grads for input
        # and scale) is training-only; only the forward pass is implemented.
        return scale_quant_forward(x, self.scale, self.bit, self.half)


# ----------------------------------------------------------------------------
# Pure-JAX reference for a sanity check
# ----------------------------------------------------------------------------
def _ref_scale_quant(x, s, bit, half):
    qbit = bit + 1 if half else bit
    max_q = 2.0 ** qbit - 1.0
    min_q = -(2.0 ** qbit)
    q = jnp.clip(jnp.trunc(x.astype(jnp.float32) / s), min_q, max_q)
    return s * q


if __name__ == "__main__":
    layer = ScaleLayerPallas(scale=2.0 ** (-5), bit=8, half=True)
    key = jax.random.PRNGKey(0)
    k1, k2 = jax.random.split(key)

    # Case 1: float32 activations (batch=2, seq=8, hidden=32) — bit-exact path.
    x32 = jax.random.normal(k1, (2, 8, 32), jnp.float32)
    y32 = jax.block_until_ready(layer(x32))
    ref32 = _ref_scale_quant(x32, layer.scale[0], layer.bit, layer.half)
    assert y32.shape == x32.shape and y32.dtype == x32.dtype
    assert jnp.allclose(y32, ref32, atol=1e-6, rtol=1e-6), \
        float(jnp.max(jnp.abs(y32 - ref32)))

    # Case 2: bfloat16 activations (batch=2, seq=128, hidden=128) — exercises
    # the native-dtype streaming path and the >=2-step (megacore) grid.
    x16 = jax.random.normal(k2, (2, 128, 128), jnp.float32).astype(jnp.bfloat16)
    y16 = jax.block_until_ready(layer(x16))
    ref16 = _ref_scale_quant(x16, layer.scale[0], layer.bit, layer.half)
    assert y16.shape == x16.shape and y16.dtype == x16.dtype
    assert jnp.allclose(y16.astype(jnp.float32),
                        ref16.astype(jnp.bfloat16).astype(jnp.float32),
                        atol=2e-2, rtol=2e-2), \
        float(jnp.max(jnp.abs(y16.astype(jnp.float32) - ref16)))

    print("KERNEL_OK")
</pallas_src>

<mosaic_0001>
module attributes {stable_mosaic.version = 11 : i64} {
  func.func @_scale_quant_kernel(%arg0: i32, %arg1: memref<1x1xf32, #tpu.memory_space<smem>>, %arg2: memref<1x512xf32, #tpu.memory_space<vmem>>, %arg3: memref<1x512xf32, #tpu.memory_space<vmem>>) attributes {dimension_semantics = [#tpu.dimension_semantics<parallel>], iteration_bounds = array<i64: 1>, scalar_prefetch = 0 : i64, scratch_operands = 0 : i64, tpu.core_type = #tpu.core_type<tc>, window_params = [{transform_indices = @transform_0, window_bounds = array<i64: 1, 1>}, {transform_indices = @transform_1, window_bounds = array<i64: 1, 512>}, {transform_indices = @transform_2, window_bounds = array<i64: 1, 512>}]} {
    %c0 = arith.constant 0 : index
    %c0_0 = arith.constant 0 : index
    %0 = memref.load %arg1[%c0, %c0_0] : memref<1x1xf32, #tpu.memory_space<smem>>
    %c0_1 = arith.constant 0 : index
    %c0_2 = arith.constant 0 : index
    %1 = vector.load %arg2[%c0_1, %c0_2] : memref<1x512xf32, #tpu.memory_space<vmem>>, vector<1x512xf32>
    %2 = vector.broadcast %0 : f32 to vector<1x512xf32>
    %3 = arith.divf %1, %2 : vector<1x512xf32>
    %cst = arith.constant 0.000000e+00 : f32
    %4 = vector.broadcast %cst : f32 to vector<1x512xf32>
    %5 = arith.cmpf olt, %3, %4 : vector<1x512xf32>
    %6 = math.ceil %3 : vector<1x512xf32>
    %7 = math.floor %3 : vector<1x512xf32>
    %8 = arith.select %5, %6, %7 : vector<1x512xi1>, vector<1x512xf32>
    %cst_3 = arith.constant -5.120000e+02 : f32
    %cst_4 = arith.constant 5.110000e+02 : f32
    %9 = vector.broadcast %cst_3 : f32 to vector<1x512xf32>
    %10 = arith.maximumf %9, %8 : vector<1x512xf32>
    %11 = vector.broadcast %cst_4 : f32 to vector<1x512xf32>
    %12 = arith.minimumf %11, %10 : vector<1x512xf32>
    %13 = vector.broadcast %0 : f32 to vector<1x512xf32>
    %14 = arith.mulf %13, %12 : vector<1x512xf32>
    %c0_5 = arith.constant 0 : index
    %c0_6 = arith.constant 0 : index
    %15 = vector.load %arg3[%c0_5, %c0_6] : memref<1x512xf32, #tpu.memory_space<vmem>>, vector<1x512xf32>
    tpu.vector_store %arg3[%c0_5, %c0_6], %14 {strides = array<i32>} : memref<1x512xf32, #tpu.memory_space<vmem>>, vector<1x512xf32>,
    return
  }
  func.func @transform_0(%arg0: i32) -> (i32, i32) {
    %c0_i32 = arith.constant 0 : i32
    %c0_i32_0 = arith.constant 0 : i32
    %c0_i32_1 = arith.constant 0 : i32
    return %c0_i32, %c0_i32_0 : i32, i32
  }
  func.func @transform_1(%arg0: i32) -> (i32, i32) {
    %c0_i32 = arith.constant 0 : i32
    %c0_i32_0 = arith.constant 0 : i32
    return %arg0, %c0_i32 : i32, i32
  }
  func.func @transform_2(%arg0: i32) -> (i32, i32) {
    %c0_i32 = arith.constant 0 : i32
    %c0_i32_0 = arith.constant 0 : i32
    return %arg0, %c0_i32 : i32, i32
  }
}

</mosaic_0001>

<llo_original>
// kernel: tpu_custom_call.1
$region0: #{tpu_custom_call.1}
  #allocation0 [shape = 'u32[]', space=smem, size = 0x4, offset = 0x4, fixed_abs, tag = 'smem constant byte address 0x4 - core index']
  #allocation1 [shape = 'u32[144,128]{1,0:T(1,128)}', space=vmem, size = 0x12000, scoped, tag = 'internal scratch']
  #allocation2 [shape = 'f32[1,1]{1,0:T(1,128)S(6)}', space=smem, size = 0x200, scoped, tag = 'scoped memory for tpu_custom_call.1']
  %s0 = inlined_call_operand.<no memory space> [shape: f32[1,1], index: 0, kind: input, shape index: {}]
  %s1 = inlined_call_operand.hbm [shape: f32[1,512], index: 1, kind: input, shape index: {}]
  %s2 = inlined_call_operand.hbm [shape: f32[1,512], index: 2, kind: output, shape index: {}]
  %s3 = sld [smem:[#allocation0]]
  $region22: #{tpu_custom_call.1} parent=0
    _
  %s5 = ssub.s32 1, %s3
  %s6 = scalar_select 0, %s5, %s3
  %7 = sst [smem:[#allocation2]] %s0
  $region1: #{tpu_custom_call.1} parent=0
    #allocation3 [shape = 'u8[2048]{0}', space=vmem, size = 0x800, scoped, tag = 'input window, operand 1, single buffered']
    #allocation4 [shape = 's32[1]{0}', space=sflag, size = 0x4, scoped, tag = 'scoped memory for tpu_custom_call.1']
    #allocation5 [shape = 's32[1]{0}', space=sflag, size = 0x4, scoped, tag = 'scoped memory for tpu_custom_call.1']
    #allocation6 [shape = 'u8[2048]{0}', space=vmem, size = 0x800, scoped, tag = 'output window, operand 0, single buffered']
    %8 = vsyncpa [#allocation4], 0
    %9 = vsyncpa [#allocation5], 0
    // Predicated region
    $region2: #{tpu_custom_call.1} parent=1 // pred_check
      _
    $region3: #{tpu_custom_call.1} parent=1 // pred_check_branch
      %11 = sbr.rel (0) target = $region5
    $region4: #{tpu_custom_call.1} parent=1 // pred_region
      _
    $region5: #{tpu_custom_call.1} parent=1 // pred_fallthru
      _
    // Predicated region
    $region6: #{tpu_custom_call.1} parent=1 // pred_check
      _
    $region7: #{tpu_custom_call.1} parent=1 // pred_check_branch
      %13 = sbr.rel (0) target = $region9
    $region8: #{tpu_custom_call.1} parent=1 // pred_region
      %s15 = ssub.s32 64, 64
      %16 = vsyncadd [#allocation4], %s15
      %s18 = sshll.u32 [#allocation3], 4
      %s19 = int_to_ptr.vmem [resolvable:$true] %s18
      %21 = dma.hbm_to_vmem [thread:$0]  %s1, 64, %s19, [#allocation4]
    $region9: #{tpu_custom_call.1} parent=1 // pred_fallthru
      _
    // Predicated region
    $region10: #{tpu_custom_call.1} parent=1 // pred_check
      _
    $region11: #{tpu_custom_call.1} parent=1 // pred_check_branch
      %23 = sbr.rel (0) target = $region13
    $region12: #{tpu_custom_call.1} parent=1 // pred_region
      %24 = dma.done [#allocation4], 64
    $region13: #{tpu_custom_call.1} parent=1 // pred_fallthru
      _
    %s25 = sld [smem:[#allocation2]]
    %v26 = vld [vmem:[#allocation3] sm:$0xf]
    %v27 = vstv %s25
    %v28 = vrcp.pop %v27
    %v29 = vmul.f32 %v26, %v28
    %vm30 = vcmp.lt.f32.partialorder %v29, 0.0
    %v31 = vceil.f32 %v29
    %v32 = vfloor.f32 %v29
    %v33 = vsel %vm30, %v31, %v32
    %v34 = vmax.f32 %v33, -512.0
    %v35 = vmin.f32 %v34, 511.0
    %v36 = vmul.f32 %v27, %v35
    %v37 = vlaneseq
    %vm38 = vcmp.ge.s32.totalorder %v37, 0
    %vm39 = vcmp.lt.s32.totalorder %v37, 512
    %vm40 = vmand %vm38, %vm39
    %41 = vst.msk [vmem:[#allocation6] sm:$0xf] %vm40, %v36
    // Predicated region
    $region14: #{tpu_custom_call.1} parent=1 // pred_check
      _
    $region15: #{tpu_custom_call.1} parent=1 // pred_check_branch
      %43 = sbr.rel (0) target = $region17
    $region16: #{tpu_custom_call.1} parent=1 // pred_region
      %s45 = ssub.s32 64, 64
      %46 = vsyncadd [#allocation5], %s45
      %s48 = sshll.u32 [#allocation6], 4
      %s49 = int_to_ptr.vmem [resolvable:$true] %s48
      %51 = dma.vmem_to_hbm [thread:$0]  %s49, 64, %s2, [#allocation5]
    $region17: #{tpu_custom_call.1} parent=1 // pred_fallthru
      _
    // Predicated region
    $region18: #{tpu_custom_call.1} parent=1 // pred_check
      _
    $region19: #{tpu_custom_call.1} parent=1 // pred_check_branch
      %53 = sbr.rel (0) target = $region21
    $region20: #{tpu_custom_call.1} parent=1 // pred_region
      %54 = dma.done [#allocation5], 64
    $region21: #{tpu_custom_call.1} parent=1 // pred_fallthru
      _
    %55 = vsyncpa [#allocation4], 1
    %56 = vsyncpa [#allocation5], 1

</llo_original>
